<compile_context>
chip_gen: v7x
topology: tpu7x:2x2x1
jax: 0.10.0
libtpu: 0.0.40
codegen_flags: <defaults>
</compile_context>

<pallas_src>
import functools

import jax
import jax.numpy as jnp
from jax import lax
from jax.experimental import pallas as pl
from jax.experimental.pallas import tpu as pltpu


def _gram_kernel(*refs, inv_total, inv_mm, compute_loss):
    """Accumulate a partial Gram over one K-tile; scale (+ optional MSE) on last step."""
    if compute_loss:
        feat_ref, tgt_hbm, g_ref, loss_ref, tgt_vmem, copy_sem = refs
    else:
        feat_ref, g_ref = refs

    k = pl.program_id(0)

    @pl.when(k == 0)
    def _():
        g_ref[...] = jnp.zeros_like(g_ref)

    f = feat_ref[...]                                   # (M, tk), input dtype
    # Contract the lane (K) axis of both operands on the MXU; no transpose needed.
    g_ref[...] += lax.dot_general(
        f, f,
        dimension_numbers=(((1,), (1,)), ((), ())),
        preferred_element_type=jnp.float32,
    )

    @pl.when(k == pl.num_programs(0) - 1)
    def _():
        g = g_ref[...] * inv_total                      # .div(B*C*H*W)
        g_ref[...] = g
        if compute_loss:
            # Target Gram lives in HBM; fetch it only for this one-shot epilogue.
            cp = pltpu.make_async_copy(tgt_hbm, tgt_vmem, copy_sem)
            cp.start()
            cp.wait()
            diff = g - tgt_vmem[...]
            # F.mse_loss(G, target, reduction='mean') over (B*C)^2 elements.
            loss_ref[...] = jnp.sum(diff * diff, keepdims=True) * inv_mm


def _gram_pallas(x, target_gram=None, *, tk=512):
    """Gram matrix of NCHW `x`; if `target_gram` is given, also the fused MSE loss."""
    B, C, H, W = x.shape
    M = B * C
    K = H * W
    feats = x.reshape(M, K)                             # keep input dtype (bf16 stays bf16)

    # K tile: multiple of 128, capped at `tk`; zero-pad K so tiles divide evenly.
    k128 = ((K + 127) // 128) * 128
    tk = max(128, min((tk // 128) * 128, k128))
    kp = ((k128 + tk - 1) // tk) * tk
    if kp != K:
        feats = jnp.pad(feats, ((0, 0), (0, kp - K)))
    grid = (kp // tk,)

    compute_loss = target_gram is not None
    inv_total = 1.0 / float(B * C * H * W)
    inv_mm = 1.0 / float(M * M)

    kernel = functools.partial(
        _gram_kernel, inv_total=inv_total, inv_mm=inv_mm, compute_loss=compute_loss)

    feat_spec = pl.BlockSpec((M, tk), lambda k: (0, k))   # K-tile of features
    g_spec = pl.BlockSpec((M, M), lambda k: (0, 0))       # resident Gram accumulator

    # Explicit VMEM budget: double-buffered feature tiles + resident G (+ target scratch
    # for the fused-loss variant) with 2x headroom, capped at v7x's 64 MiB physical.
    itemsize = jnp.dtype(feats.dtype).itemsize
    vmem_bytes = 2 * M * tk * itemsize + 2 * M * M * 4
    if compute_loss:
        vmem_bytes += M * M * 4
    vmem_limit = int(min(max(2 * vmem_bytes + (1 << 20), 8 << 20), 64 << 20))

    cparams = pltpu.CompilerParams(
        dimension_semantics=("arbitrary",),               # K is a reduction axis
        vmem_limit_bytes=vmem_limit,
    )

    if compute_loss:
        g, loss = pl.pallas_call(
            kernel,
            out_shape=(
                jax.ShapeDtypeStruct((M, M), jnp.float32),
                jax.ShapeDtypeStruct((1, 1), jnp.float32),
            ),
            grid_spec=pltpu.PrefetchScalarGridSpec(
                num_scalar_prefetch=0,
                grid=grid,
                in_specs=[
                    feat_spec,
                    pl.BlockSpec(memory_space=pl.ANY),    # target Gram stays in HBM
                ],
                out_specs=(
                    g_spec,
                    pl.BlockSpec((1, 1), lambda k: (0, 0)),
                ),
                scratch_shapes=[
                    pltpu.VMEM((M, M), jnp.float32),      # epilogue-only target buffer
                    pltpu.SemaphoreType.DMA(()),
                ],
            ),
            compiler_params=cparams,
        )(feats, target_gram)
        return g, loss[0, 0]

    g = pl.pallas_call(
        kernel,
        out_shape=jax.ShapeDtypeStruct((M, M), jnp.float32),
        grid_spec=pltpu.PrefetchScalarGridSpec(
            num_scalar_prefetch=0,
            grid=grid,
            in_specs=[feat_spec],
            out_specs=g_spec,
        ),
        compiler_params=cparams,
    )(feats)
    return g


def gram_matrix(x, tk=512):
    """Pallas equivalent of the PyTorch gram_matrix (Gram only, no loss epilogue)."""
    return _gram_pallas(x, None, tk=tk)


def gram_and_mse_loss(x, target_gram, tk=512):
    """Returns (G, mse(G, target_gram)) computed in a single fused Pallas kernel."""
    return _gram_pallas(x, target_gram, tk=tk)


class StyleLoss:
    """Mirror of the PyTorch StyleLoss module (forward is identity; stores .loss)."""

    def __init__(self, target_feature):
        # Gram-only kernel variant: no zero-target DMA / MSE epilogue during setup.
        self.target = jax.lax.stop_gradient(gram_matrix(target_feature))
        self.weight = 1.0
        self.loss = None

    def __call__(self, x):
        _, self.loss = gram_and_mse_loss(x, self.target)
        return x                                          # pass-through input


def _reference(x, target_gram):
    B, C, H, W = x.shape
    f = x.reshape(B * C, H * W).astype(jnp.float32)
    G = (f @ f.T) / float(B * C * H * W)
    return G, jnp.mean((G - target_gram) ** 2)


if __name__ == "__main__":
    key = jax.random.PRNGKey(0)
    k1, k2, k3 = jax.random.split(key, 3)

    # Small NCHW feature maps: B=2, C=4, H=W=16.
    target_feature = jax.random.normal(k1, (2, 4, 16, 16), dtype=jnp.float32)
    x = jax.random.normal(k2, (2, 4, 16, 16), dtype=jnp.float32)

    style = StyleLoss(target_feature)
    out = jax.block_until_ready(style(x))
    loss = jax.block_until_ready(style.loss)

    # Correctness vs pure-JAX reference.
    tgt_ref, _ = _reference(target_feature, jnp.zeros((8, 8), jnp.float32))
    G_ref, loss_ref = _reference(x, tgt_ref)
    assert out.shape == x.shape and bool(jnp.allclose(out, x))
    assert bool(jnp.allclose(style.target, tgt_ref, atol=1e-5, rtol=1e-5))
    assert bool(jnp.allclose(loss, loss_ref, atol=1e-5, rtol=1e-5))

    # Exercise the K-padding path with a non-multiple-of-128 spatial size (14x14).
    x2 = jax.random.normal(k3, (2, 4, 14, 14), dtype=jnp.float32)
    zero_tgt = jnp.zeros((8, 8), jnp.float32)
    g2, loss2 = gram_and_mse_loss(x2, zero_tgt)
    g2 = jax.block_until_ready(g2)
    g2_ref, loss2_ref = _reference(x2, zero_tgt)
    assert bool(jnp.allclose(g2, g2_ref, atol=1e-5, rtol=1e-5))
    assert bool(jnp.allclose(loss2, loss2_ref, atol=1e-5, rtol=1e-5))

    print("KERNEL_OK")
</pallas_src>

<mosaic_0001>
module attributes {stable_mosaic.version = 11 : i64} {
  func.func @_gram_kernel(%arg0: i32, %arg1: memref<8x256xf32, #tpu.memory_space<vmem>>, %arg2: memref<8x8xf32, #tpu.memory_space<vmem>>) attributes {dimension_semantics = [#tpu.dimension_semantics<arbitrary>], iteration_bounds = array<i64: 1>, scalar_prefetch = 0 : i64, scratch_operands = 0 : i64, tpu.core_type = #tpu.core_type<tc>, window_params = [{transform_indices = @transform_0, window_bounds = array<i64: 8, 256>}, {pipeline_mode = #tpu.pipeline_mode<synchronous>, transform_indices = @transform_1, window_bounds = array<i64: 8, 8>}]} {
    %c0_i32 = arith.constant 0 : i32
    %0 = arith.cmpi eq, %arg0, %c0_i32 : i32
    %1 = arith.extui %0 : i1 to i32
    %c0_i32_0 = arith.constant 0 : i32
    %2 = arith.cmpi ne, %1, %c0_i32_0 : i32
    scf.if %2 {
      %cst_8 = arith.constant 0.000000e+00 : f32
      %11 = vector.broadcast %cst_8 : f32 to vector<8x8xf32>
      %c0_9 = arith.constant 0 : index
      %c0_10 = arith.constant 0 : index
      %12 = vector.load %arg2[%c0_9, %c0_10] : memref<8x8xf32, #tpu.memory_space<vmem>>, vector<8x8xf32>
      tpu.vector_store %arg2[%c0_9, %c0_10], %11 {strides = array<i32>} : memref<8x8xf32, #tpu.memory_space<vmem>>, vector<8x8xf32>,
    } else {
    }
    %c0 = arith.constant 0 : index
    %c0_1 = arith.constant 0 : index
    %3 = vector.load %arg1[%c0, %c0_1] : memref<8x256xf32, #tpu.memory_space<vmem>>, vector<8x256xf32>
    %c0_2 = arith.constant 0 : index
    %c0_3 = arith.constant 0 : index
    %4 = vector.load %arg2[%c0_2, %c0_3] : memref<8x8xf32, #tpu.memory_space<vmem>>, vector<8x8xf32>
    %cst = arith.constant dense<0.000000e+00> : vector<8x8xf32>
    %5 = tpu.matmul %3, %3, %cst {dimension_numbers = #tpu.dot_dimension_numbers<[1], [1], [0], [0], [0, 0, 1, 0], [], []>} : vector<8x256xf32>, vector<8x256xf32>, vector<8x8xf32> -> vector<8x8xf32>
    %6 = arith.addf %4, %5 : vector<8x8xf32>
    %c0_4 = arith.constant 0 : index
    %c0_5 = arith.constant 0 : index
    %7 = vector.load %arg2[%c0_4, %c0_5] : memref<8x8xf32, #tpu.memory_space<vmem>>, vector<8x8xf32>
    tpu.vector_store %arg2[%c0_4, %c0_5], %6 {strides = array<i32>} : memref<8x8xf32, #tpu.memory_space<vmem>>, vector<8x8xf32>,
    %c0_i32_6 = arith.constant 0 : i32
    %8 = arith.cmpi eq, %arg0, %c0_i32_6 : i32
    %9 = arith.extui %8 : i1 to i32
    %c0_i32_7 = arith.constant 0 : i32
    %10 = arith.cmpi ne, %9, %c0_i32_7 : i32
    scf.if %10 {
      %c0_8 = arith.constant 0 : index
      %c0_9 = arith.constant 0 : index
      %11 = vector.load %arg2[%c0_8, %c0_9] : memref<8x8xf32, #tpu.memory_space<vmem>>, vector<8x8xf32>
      %cst_10 = arith.constant 4.8828125E-4 : f32
      %12 = vector.broadcast %cst_10 : f32 to vector<8x8xf32>
      %13 = arith.mulf %11, %12 : vector<8x8xf32>
      %c0_11 = arith.constant 0 : index
      %c0_12 = arith.constant 0 : index
      %14 = vector.load %arg2[%c0_11, %c0_12] : memref<8x8xf32, #tpu.memory_space<vmem>>, vector<8x8xf32>
      tpu.vector_store %arg2[%c0_11, %c0_12], %13 {strides = array<i32>} : memref<8x8xf32, #tpu.memory_space<vmem>>, vector<8x8xf32>,
    } else {
    }
    return
  }
  func.func @transform_0(%arg0: i32) -> (i32, i32) {
    %c0_i32 = arith.constant 0 : i32
    %c0_i32_0 = arith.constant 0 : i32
    return %c0_i32, %arg0 : i32, i32
  }
  func.func @transform_1(%arg0: i32) -> (i32, i32) {
    %c0_i32 = arith.constant 0 : i32
    %c0_i32_0 = arith.constant 0 : i32
    %c0_i32_1 = arith.constant 0 : i32
    return %c0_i32, %c0_i32_0 : i32, i32
  }
}

</mosaic_0001>

<llo_original>
// kernel: tpu_custom_call.1
$region0: #{tpu_custom_call.1}
  #allocation0 [shape = 'u32[]', space=smem, size = 0x4, offset = 0x4, fixed_abs, tag = 'smem constant byte address 0x4 - core index']
  #allocation1 [shape = 'u32[144,128]{1,0:T(1,128)}', space=vmem, size = 0x12000, scoped, tag = 'internal scratch']
  %s0 = inlined_call_operand.hbm [shape: f32[8,256], index: 0, kind: input, shape index: {}]
  %s1 = inlined_call_operand.hbm [shape: f32[8,8], index: 1, kind: output, shape index: {}]
  %s2 = sld [smem:[#allocation0]]
  $region26: #{tpu_custom_call.1} parent=0
    _
  %s4 = ssub.s32 1, %s2
  %s5 = scalar_select 0, %s4, %s2
  $region1: #{tpu_custom_call.1} parent=0
    #allocation2 [shape = 'u8[8192]{0}', space=vmem, size = 0x2000, scoped, tag = 'input window, operand 0, single buffered']
    #allocation3 [shape = 's32[1]{0}', space=sflag, size = 0x4, scoped, tag = 'scoped memory for tpu_custom_call.1']
    #allocation4 [shape = 's32[1]{0}', space=sflag, size = 0x4, scoped, tag = 'scoped memory for tpu_custom_call.1']
    #allocation5 [shape = 'u8[4096]{0}', space=vmem, size = 0x1000, scoped, tag = 'output window, operand 0, single buffered']
    %6 = vsyncpa [#allocation3], 0
    %7 = vsyncpa [#allocation4], 0
    // Predicated region
    $region2: #{tpu_custom_call.1} parent=1 // pred_check
      _
    $region3: #{tpu_custom_call.1} parent=1 // pred_check_branch
      %9 = sbr.rel (0) target = $region5
    $region4: #{tpu_custom_call.1} parent=1 // pred_region
      %s11 = ssub.s32 256, 256
      %12 = vsyncadd [#allocation3], %s11
      %s14 = sshll.u32 [#allocation2], 4
      %s15 = int_to_ptr.vmem [resolvable:$true] %s14
      %17 = dma.hbm_to_vmem [thread:$0]  %s0, 256, %s15, [#allocation3]
    $region5: #{tpu_custom_call.1} parent=1 // pred_fallthru
      _
    // Predicated region
    $region6: #{tpu_custom_call.1} parent=1 // pred_check
      _
    $region7: #{tpu_custom_call.1} parent=1 // pred_check_branch
      %19 = sbr.rel (0) target = $region9
    $region8: #{tpu_custom_call.1} parent=1 // pred_region
      %20 = dma.done [#allocation3], 256
    $region9: #{tpu_custom_call.1} parent=1 // pred_fallthru
      _
    %p21 = scmp.eq.s32.totalorder 0, 0
    // Predicated region
    $region10: #{tpu_custom_call.1} parent=1 // pred_check
      %p22 = pneg %p21
    $region11: #{tpu_custom_call.1} parent=1 // pred_check_branch
      %24 = sbr.rel (%p22) target = $region13
    $region12: #{tpu_custom_call.1} parent=1 // pred_region
      %vm25 = vcmask 64512
      %26 = vst.msk [vmem:[#allocation5] sm:$0xff] %vm25, 0.0
    $region13: #{tpu_custom_call.1} parent=1 // pred_fallthru
      _
    %v27 = vld [vmem:[#allocation2] sm:$0xff]
    %v28 = vld [vmem:[#allocation2 + $0x8] sm:$0xff]
    %v29 = vld [vmem:[#allocation5] sm:$0xff]
    %30 = vmatprep.subr.mxu0 %v28
    %31 = vmatpush1.xpose.msra.mxu0 %v27
    %32 = vmatprep.subr.mxu0 0.0
    %33 = vmatpush1.xpose.msra.mxu0 0.0
    %34 = vmatprep.subr.mxu0 0.0
    %35 = vmatpush1.xpose.msra.mxu0 0.0
    %36 = vmatprep.subr.mxu0 0.0
    %37 = vmatpush1.xpose.msra.mxu0 0.0
    %38 = vmatprep.subr.mxu0 0.0
    %39 = vmatpush1.xpose.msra.mxu0 0.0
    %40 = vmatprep.subr.mxu0 0.0
    %41 = vmatpush1.xpose.msra.mxu0 0.0
    %42 = vmatprep.subr.mxu0 0.0
    %43 = vmatpush1.xpose.msra.mxu0 0.0
    %44 = vmatprep.subr.mxu0 0.0
    %45 = vmatpush1.xpose.msra.mxu0 0.0
    %46 = vmatprep.subr.mxu0 0.0
    %47 = vmatpush1.xpose.msra.mxu0 0.0
    %48 = vmatprep.subr.mxu0 0.0
    %49 = vmatpush1.xpose.msra.mxu0 0.0
    %50 = vmatprep.subr.mxu0 0.0
    %51 = vmatpush1.xpose.msra.mxu0 0.0
    %52 = vmatprep.subr.mxu0 0.0
    %53 = vmatpush1.xpose.msra.mxu0 0.0
    %54 = vmatprep.subr.mxu0 0.0
    %55 = vmatpush1.xpose.msra.mxu0 0.0
    %56 = vmatprep.subr.mxu0 0.0
    %57 = vmatpush1.xpose.msra.mxu0 0.0
    %58 = vmatprep.subr.mxu0 0.0
    %59 = vmatpush1.xpose.msra.mxu0 0.0
    %60 = vmatprep.subr.mxu0 0.0
    %61 = vmatpush1.xpose.msra.mxu0 0.0
    %62 = vmatprep.subr.mxu0 0.0
    %63 = vmatpush1.xpose.msra.mxu0 0.0
    %64 = vmatprep.subr.mxu0 0.0
    %65 = vmatpush1.xpose.msra.mxu0 0.0
    %66 = vmatprep.subr.mxu0 0.0
    %67 = vmatpush1.xpose.msra.mxu0 0.0
    %68 = vmatprep.subr.mxu0 0.0
    %69 = vmatpush1.xpose.msra.mxu0 0.0
    %70 = vmatprep.subr.mxu0 0.0
    %71 = vmatpush1.xpose.msra.mxu0 0.0
    %72 = vmatprep.subr.mxu0 0.0
    %73 = vmatpush1.xpose.msra.mxu0 0.0
    %74 = vmatprep.subr.mxu0 0.0
    %75 = vmatpush1.xpose.msra.mxu0 0.0
    %76 = vmatprep.subr.mxu0 0.0
    %77 = vmatpush1.xpose.msra.mxu0 0.0
    %78 = vmatprep.subr.mxu0 0.0
    %79 = vmatpush1.xpose.msra.mxu0 0.0
    %80 = vmatprep.subr.mxu0 0.0
    %81 = vmatpush1.xpose.msra.mxu0 0.0
    %82 = vmatprep.subr.mxu0 0.0
    %83 = vmatpush1.xpose.msra.mxu0 0.0
    %84 = vmatprep.subr.mxu0 0.0
    %85 = vmatpush1.xpose.msra.mxu0 0.0
    %86 = vmatprep.subr.mxu0 0.0
    %87 = vmatpush1.xpose.msra.mxu0 0.0
    %88 = vmatprep.subr.mxu0 0.0
    %89 = vmatpush1.xpose.msra.mxu0 0.0
    %90 = vmatprep.subr.mxu0 0.0
    %91 = vmatpush1.xpose.msra.mxu0 0.0
    %92 = vmatprep.subr.mxu0 0.0
    %93 = vmatpush1.xpose.msra.mxu0 0.0
    %94 = vmatprep.mubr.f32.mxu0 %v28
    %95 = vmatmul.mubr.f32.gmra.mrb[0].mxu0 %v27
    %v96 = vpop.f32.mrb[0].mxu0
    %v97 = vadd.f32 0.0, %v96
    %v98 = vpop.f32.mrb[0].mxu0
    %99 = vdwg.mxu0
    %v100 = vadd.f32 %v29, %v97
    %vm101 = vcmask 64512
    %102 = vst.msk [vmem:[#allocation5] sm:$0xff] %vm101, %v100
    // Predicated region
    $region14: #{tpu_custom_call.1} parent=1 // pred_check
      %p103 = pneg %p21
    $region15: #{tpu_custom_call.1} parent=1 // pred_check_branch
      %105 = sbr.rel (%p103) target = $region17
    $region16: #{tpu_custom_call.1} parent=1 // pred_region
      %v106 = vld [vmem:[#allocation5] sm:$0xff]
      %v107 = vmul.f32 %v106, 0.00048828125
      %108 = vst.msk [vmem:[#allocation5] sm:$0xff] %vm101, %v107
    $region17: #{tpu_custom_call.1} parent=1 // pred_fallthru
      _
    // Predicated region
    $region18: #{tpu_custom_call.1} parent=1 // pred_check
      _
    $region19: #{tpu_custom_call.1} parent=1 // pred_check_branch
      %110 = sbr.rel (0) target = $region21
    $region20: #{tpu_custom_call.1} parent=1 // pred_region
      %s112 = ssub.s32 128, 128
      %113 = vsyncadd [#allocation4], %s112
      %s115 = sshll.u32 [#allocation5], 4
      %s116 = int_to_ptr.vmem [resolvable:$true] %s115
      %118 = dma.vmem_to_hbm [thread:$0]  %s116, 128, %s1, [#allocation4]
    $region21: #{tpu_custom_call.1} parent=1 // pred_fallthru
      _
    // Predicated region
    $region22: #{tpu_custom_call.1} parent=1 // pred_check
      _
    $region23: #{tpu_custom_call.1} parent=1 // pred_check_branch
      %120 = sbr.rel (0) target = $region25
    $region24: #{tpu_custom_call.1} parent=1 // pred_region
      %121 = dma.done [#allocation4], 128
    $region25: #{tpu_custom_call.1} parent=1 // pred_fallthru
      _
    %122 = vsyncpa [#allocation3], 1
    %123 = vsyncpa [#allocation4], 1

</llo_original>
